<compile_context>
chip_gen: v7x
topology: tpu7x:2x2x1
jax: 0.10.0
libtpu: 0.0.40
codegen_flags: <defaults>
</compile_context>

<pallas_src>
import jax
import jax.numpy as jnp
from jax.experimental import pallas as pl
from jax.experimental.pallas import tpu as pltpu


def _round_up(x, m):
    return (x + m - 1) // m * m


def _sublane_multiple(dtype):
    # f32 -> 8 rows per vreg, bf16 -> 16, int8/fp8 -> 32 (sub-32-bit packs on sublanes).
    return max(8, 32 // jnp.dtype(dtype).itemsize)


def _choose_l_tile(B, L, lt_cap):
    """Pick the lane tile over the per-batch token axis L. Returns (lt, L_pad)."""
    cap = max(128, lt_cap - lt_cap % 128)
    if L % 128 == 0:
        q = L // 128
        d = min(q, cap // 128)
        while q % d:
            d -= 1
        lt = 128 * d
        n_lt = L // lt
        # v7x has 2 TensorCores: prefer an even total "parallel" step count when free.
        if (B * n_lt) % 2 == 1 and lt % 256 == 0:
            lt //= 2
        return lt, L
    if L <= 2 * cap:
        # Full-extent lane block (block dim == array dim): no padding, no post-slice;
        # only the tail store is masked.
        return L, L
    # Huge ragged L: tile at the cap and pad (accept one output slice pass).
    return cap, _round_up(L, cap)


def _make_kernel(apply_act, apply_norm, eps):
    """out(E, lt) = W_aug(E, K_pad) @ slab(K_pad, lt)  [+ SiLU] [+ LayerNorm over E]."""

    def compute(p_ref, w_ref, g_ref, b_ref, o_ref):
        # p_ref: (K_pad, lt) im2col slab with the bias row folded in (lane axis = tokens)
        # w_ref: (E, K_pad)  flattened weight with the bias column (grid-invariant)
        y = jnp.dot(w_ref[...], p_ref[...],
                    preferred_element_type=jnp.float32)            # (E, lt), MXU
        if apply_act:
            y = y * jax.nn.sigmoid(y)                               # SiLU (EUP sigmoid)
        if apply_norm:
            inv_e = 1.0 / y.shape[0]
            mean = jnp.sum(y, axis=0, keepdims=True) * inv_e        # (1, lt)
            d = y - mean
            var = jnp.sum(d * d, axis=0, keepdims=True) * inv_e     # two-pass (stable)
            y = d * jax.lax.rsqrt(var + eps)
            y = y * g_ref[...].astype(jnp.float32) + b_ref[...].astype(jnp.float32)
        o_ref[...] = y.astype(o_ref.dtype)

    if apply_norm:
        def kernel(p_ref, w_ref, g_ref, b_ref, o_ref):
            compute(p_ref, w_ref, g_ref, b_ref, o_ref)
    else:
        def kernel(p_ref, w_ref, o_ref):
            compute(p_ref, w_ref, None, None, o_ref)
    return kernel


def token_projection_forward(x, weight, bias, gamma=None, beta=None, *,
                             patch_size=1, apply_act=False, apply_norm=False,
                             eps=1e-5, lt_cap=8192, gemm_dtype=None, out_dtype=None):
    """x: (B, C, H, W). weight: (E, C, p, p). Returns (B, E, H//p, W//p).

    Computes the token-wise projection  y = W @ token + bias  for every spatial token,
    optionally followed by SiLU and/or LayerNorm over the E channels (per token).
    """
    B, C, H, W = x.shape
    E = weight.shape[0]
    p = patch_size
    assert H % p == 0 and W % p == 0, "spatial dims must be divisible by patch_size"
    Hp, Wp = H // p, W // p
    L = Hp * Wp
    K = C * p * p

    gdtype = jnp.dtype(gemm_dtype) if gemm_dtype is not None else jnp.dtype(x.dtype)
    odtype = jnp.dtype(out_dtype) if out_dtype is not None else jnp.dtype(x.dtype)

    sub = _sublane_multiple(gdtype)
    K_pad = _round_up(K + 1, sub)                 # +1 row = folded bias
    lt, L_pad = _choose_l_tile(B, L, lt_cap)
    n_lt = L_pad // lt

    # im2col slab (B, K+1, L): K ordered (c, kh, kw) to match the flattened weight,
    # tokens (hp, wp) on the minor/lane axis; final row of ones carries the bias.
    xg = x.astype(gdtype)
    pt = xg.reshape(B, C, Hp, p, Wp, p)
    pt = jnp.transpose(pt, (0, 1, 3, 5, 2, 4)).reshape(B, K, L)
    pt = jnp.concatenate([pt, jnp.ones((B, 1, L), dtype=gdtype)], axis=1)
    pt = jnp.pad(pt, ((0, 0), (0, K_pad - (K + 1)), (0, L_pad - L)))

    w_aug = jnp.concatenate([weight.reshape(E, K).astype(gdtype),
                             bias.reshape(E, 1).astype(gdtype)], axis=1)
    w_aug = jnp.pad(w_aug, ((0, 0), (0, K_pad - (K + 1))))

    in_specs = [
        pl.BlockSpec((None, K_pad, lt), lambda b, l: (b, 0, l)),   # slab tile
        pl.BlockSpec((E, K_pad), lambda b, l: (0, 0)),             # weight (resident)
    ]
    args = [pt, w_aug]
    if apply_norm:
        in_specs += [pl.BlockSpec((E, 1), lambda b, l: (0, 0)),
                     pl.BlockSpec((E, 1), lambda b, l: (0, 0))]
        args += [gamma.reshape(E, 1), beta.reshape(E, 1)]

    kernel = _make_kernel(apply_act, apply_norm, eps)

    # Right-size the VMEM limit to the real double-buffered footprint (+ headroom).
    blk_bytes = K_pad * lt * gdtype.itemsize + E * lt * odtype.itemsize
    vmem_limit = int(min(32 * 2 ** 20, max(8 * 2 ** 20, 4 * blk_bytes)))

    out = pl.pallas_call(
        kernel,
        out_shape=jax.ShapeDtypeStruct((B, E, L_pad), odtype),
        grid_spec=pltpu.PrefetchScalarGridSpec(
            num_scalar_prefetch=0,
            grid=(B, n_lt),
            in_specs=in_specs,
            out_specs=pl.BlockSpec((None, E, lt), lambda b, l: (b, 0, l)),
        ),
        compiler_params=pltpu.CompilerParams(
            dimension_semantics=("parallel", "parallel"),
            vmem_limit_bytes=vmem_limit,
        ),
    )(*args)

    if L_pad != L:                      # only for the huge-ragged fallback path
        out = out[:, :, :L]
    return out.reshape(B, E, Hp, Wp)    # free reshape: output already (B, E, L)


def _reference(x, weight, bias, gamma, beta, *, patch_size=1, apply_act=False,
               apply_norm=False, eps=1e-5):
    """Pure-JAX reference of the PyTorch forward (conv stride=kernel=patch + act/LN)."""
    y = jax.lax.conv_general_dilated(
        x, weight, window_strides=(patch_size, patch_size), padding="VALID",
        dimension_numbers=("NCHW", "OIHW", "NCHW"))
    y = y + bias[None, :, None, None]
    if apply_act:
        y = y * jax.nn.sigmoid(y)
    if apply_norm:
        B, E, Hp, Wp = y.shape
        t = y.reshape(B, E, Hp * Wp).transpose(0, 2, 1)            # (B, L, E)
        mean = jnp.mean(t, axis=-1, keepdims=True)
        var = jnp.mean(jnp.square(t - mean), axis=-1, keepdims=True)
        t = (t - mean) * jax.lax.rsqrt(var + eps)
        t = t * gamma + beta
        y = t.transpose(0, 2, 1).reshape(B, E, Hp, Wp)
    return y


if __name__ == "__main__":
    key = jax.random.PRNGKey(0)
    ks = jax.random.split(key, 8)

    # --- Branch_2.Linear_Layer stage: token-wise Linear(32 -> 32) + SiLU
    #     (nn.Dropout is identity at inference)
    B, C, H, W, E = 2, 32, 16, 16, 32
    x1 = jax.random.normal(ks[0], (B, C, H, W), jnp.float32)
    w1 = jax.random.normal(ks[1], (E, C, 1, 1), jnp.float32) * 0.1
    b1 = jax.random.normal(ks[2], (E,), jnp.float32) * 0.1
    o1 = jax.block_until_ready(token_projection_forward(x1, w1, b1, apply_act=True))
    r1 = _reference(x1, w1, b1, None, None, apply_act=True)
    assert o1.shape == (B, E, H, W), o1.shape
    assert jnp.allclose(o1, r1, atol=2e-4, rtol=2e-4), "mismatch (Linear + SiLU)"

    # --- Branch_2.SSM_cha tail: Mamba out-projection (d_inner=4 -> out_c=32)
    #     fused with nn.LayerNorm(out_c)
    Ci = 4
    x2 = jax.random.normal(ks[3], (B, Ci, H, W), jnp.float32)
    w2 = jax.random.normal(ks[4], (E, Ci, 1, 1), jnp.float32) * 0.2
    b2 = jax.random.normal(ks[5], (E,), jnp.float32) * 0.1
    g2 = 1.0 + 0.1 * jax.random.normal(ks[6], (E,), jnp.float32)
    be2 = 0.1 * jax.random.normal(ks[7], (E,), jnp.float32)
    o2 = jax.block_until_ready(
        token_projection_forward(x2, w2, b2, g2, be2, apply_norm=True))
    r2 = _reference(x2, w2, b2, g2, be2, apply_norm=True)
    assert jnp.allclose(o2, r2, atol=5e-4, rtol=5e-4), "mismatch (proj + LayerNorm)"

    # --- patch_size > 1 path (L = 64, not a 128-multiple: full-extent lane block)
    x3 = jax.random.normal(ks[0], (2, 3, 16, 16), jnp.float32)
    w3 = jax.random.normal(ks[1], (E, 3, 2, 2), jnp.float32) * 0.1
    b3 = jax.random.normal(ks[2], (E,), jnp.float32) * 0.1
    o3 = jax.block_until_ready(token_projection_forward(x3, w3, b3, patch_size=2))
    r3 = _reference(x3, w3, b3, None, None, patch_size=2)
    assert jnp.allclose(o3, r3, atol=2e-4, rtol=2e-4), "mismatch (patchified proj)"

    print("KERNEL_OK")
</pallas_src>

<mosaic_0001>
module attributes {stable_mosaic.version = 11 : i64} {
  func.func @kernel(%arg0: i32, %arg1: i32, %arg2: memref<1x40x256xf32, #tpu.memory_space<vmem>>, %arg3: memref<32x40xf32, #tpu.memory_space<vmem>>, %arg4: memref<1x32x256xf32, #tpu.memory_space<vmem>>) attributes {dimension_semantics = [#tpu.dimension_semantics<parallel>, #tpu.dimension_semantics<parallel>], iteration_bounds = array<i64: 2, 1>, scalar_prefetch = 0 : i64, scratch_operands = 0 : i64, tpu.core_type = #tpu.core_type<tc>, window_params = [{transform_indices = @transform_0, window_bounds = array<i64: 1, 40, 256>}, {pipeline_mode = #tpu.pipeline_mode<synchronous>, transform_indices = @transform_1, window_bounds = array<i64: 32, 40>}, {transform_indices = @transform_2, window_bounds = array<i64: 1, 32, 256>}]} {
    %c0 = arith.constant 0 : index
    %c0_0 = arith.constant 0 : index
    %0 = vector.load %arg3[%c0, %c0_0] : memref<32x40xf32, #tpu.memory_space<vmem>>, vector<32x40xf32>
    %c0_1 = arith.constant 0 : index
    %c0_2 = arith.constant 0 : index
    %c0_3 = arith.constant 0 : index
    %1 = vector.load %arg2[%c0_1, %c0_2, %c0_3] : memref<1x40x256xf32, #tpu.memory_space<vmem>>, vector<1x40x256xf32>
    %2 = vector.shape_cast %1 : vector<1x40x256xf32> to vector<40x256xf32>
    %cst = arith.constant dense<0.000000e+00> : vector<32x256xf32>
    %3 = tpu.matmul %0, %2, %cst {dimension_numbers = #tpu.dot_dimension_numbers<[1], [0], [0], [1], [0, 0, 1, 1], [], []>} : vector<32x40xf32>, vector<40x256xf32>, vector<32x256xf32> -> vector<32x256xf32>
    %4 = arith.negf %3 : vector<32x256xf32>
    %5 = math.exp %4 : vector<32x256xf32>
    %cst_4 = arith.constant 1.000000e+00 : f32
    %6 = vector.broadcast %cst_4 : f32 to vector<32x256xf32>
    %7 = arith.addf %6, %5 : vector<32x256xf32>
    %8 = arith.divf %6, %7 : vector<32x256xf32>
    %9 = arith.mulf %3, %8 : vector<32x256xf32>
    %c0_5 = arith.constant 0 : index
    %c0_6 = arith.constant 0 : index
    %c0_7 = arith.constant 0 : index
    %10 = vector.load %arg4[%c0_5, %c0_6, %c0_7] : memref<1x32x256xf32, #tpu.memory_space<vmem>>, vector<1x32x256xf32>
    %11 = vector.shape_cast %10 : vector<1x32x256xf32> to vector<32x256xf32>
    %12 = vector.shape_cast %9 : vector<32x256xf32> to vector<1x32x256xf32>
    tpu.vector_store %arg4[%c0_5, %c0_6, %c0_7], %12 {strides = array<i32>} : memref<1x32x256xf32, #tpu.memory_space<vmem>>, vector<1x32x256xf32>,
    return
  }
  func.func @transform_0(%arg0: i32, %arg1: i32) -> (i32, i32, i32) {
    %c0_i32 = arith.constant 0 : i32
    %c0_i32_0 = arith.constant 0 : i32
    return %arg0, %c0_i32, %arg1 : i32, i32, i32
  }
  func.func @transform_1(%arg0: i32, %arg1: i32) -> (i32, i32) {
    %c0_i32 = arith.constant 0 : i32
    %c0_i32_0 = arith.constant 0 : i32
    %c0_i32_1 = arith.constant 0 : i32
    return %c0_i32, %c0_i32_0 : i32, i32
  }
  func.func @transform_2(%arg0: i32, %arg1: i32) -> (i32, i32, i32) {
    %c0_i32 = arith.constant 0 : i32
    %c0_i32_0 = arith.constant 0 : i32
    return %arg0, %c0_i32, %arg1 : i32, i32, i32
  }
}

</mosaic_0001>

<llo_original>
// kernel: tpu_custom_call.1
$region0: #{tpu_custom_call.1}
  #allocation0 [shape = 'u32[]', space=smem, size = 0x4, offset = 0x4, fixed_abs, tag = 'smem constant byte address 0x4 - core index']
  #allocation1 [shape = 'u32[144,128]{1,0:T(1,128)}', space=vmem, size = 0x12000, scoped, tag = 'internal scratch']
  %s0 = inlined_call_operand.hbm [shape: f32[2,40,256], index: 0, kind: input, shape index: {}]
  %s1 = inlined_call_operand.hbm [shape: f32[32,40], index: 1, kind: input, shape index: {}]
  %s2 = inlined_call_operand.hbm [shape: f32[2,32,256], index: 2, kind: output, shape index: {}]
  %s3 = sld [smem:[#allocation0]]
  $region49: #{tpu_custom_call.1} parent=0
    _
  %s5 = ssub.s32 1, %s3
  %s6 = scalar_select 0, %s5, %s3
  $region1: #{tpu_custom_call.1} parent=0
    #allocation2 [shape = 'u8[81920]{0}', space=vmem, size = 0x14000, scoped, tag = 'input window, operand 0']
    #allocation3 [shape = 's32[2]{0}', space=sflag, size = 0x8, scoped, tag = 'scoped memory for tpu_custom_call.1']
    #allocation4 [shape = 's32[2]{0}', space=sflag, size = 0x8, scoped, tag = 'scoped memory for tpu_custom_call.1']
    #allocation5 [shape = 'u8[16384]{0}', space=vmem, size = 0x4000, scoped, tag = 'input window, operand 1, single buffered']
    #allocation6 [shape = 's32[1]{0}', space=sflag, size = 0x4, scoped, tag = 'scoped memory for tpu_custom_call.1']
    #allocation7 [shape = 'u8[65536]{0}', space=vmem, size = 0x10000, scoped, tag = 'output window, operand 0']
    %7 = vsyncpa [#allocation3], 0
    %s8 = scalar_lea.sflag [#allocation3], 1
    %9 = vsyncpa %s8, 0
    %10 = vsyncpa [#allocation6], 0
    %11 = vsyncpa [#allocation4], 0
    %s12 = scalar_lea.sflag [#allocation4], 1
    %13 = vsyncpa %s12, 0
    loop: start=0, step=1, limit=4
    $region2: #{tpu_custom_call.1} parent=1 // loop_pre_header
      _
    $region3: #{tpu_custom_call.1} parent=1 // loop_header
      %s15 = sphi 0, %s19
      %p16 = scmp.ge.s32.totalorder %s15, 4
      %s22 = sphi 0, %s34
      %s23 = sphi 0, %s30
      %s24 = sphi 0, %s22
      %s25 = sphi 0, %s23
      %s26 = sphi 0, %s24
      %s27 = sphi 0, %s25
      %s39 = sphi 0, %s41
      %s42 = sphi 0, %s39
      %s43 = sphi 0, %s42
      %s59 = sphi 0, %s43
      %s63 = sphi 0, %s63
      %s65 = sphi 0, %s63
      %s66 = sphi 0, %s65
      %s80 = sphi 0, %s66
      %s88 = sphi 0, %s90
      %s91 = sphi 0, %s88
      %s92 = sphi 0, %s91
      %s108 = sphi 0, %s92
    $region4: #{tpu_custom_call.1} parent=1 // loop_header_branch
      %18 = sbr.rel (%p16) target = $region8
    $region5: #{tpu_custom_call.1} parent=1 // loop_body
      %s20 = ssub.s32 %s15, 1
      %s21 = ssub.s32 %s15, 2
      %s28 = sadd.s32 1, %s23
      %p29 = scmp.ge.s32.totalorder %s28, 1
      %s30 = scalar_select %p29, 0, %s28
      %s31 = sadd.s32 1, %s22
      %s32 = scalar_select %p29, %s31, %s22
      %p33 = scmp.ge.s32.totalorder %s32, 2
      %s34 = scalar_select %p33, 0, %s32
      %s35 = ssub.s32 %s22, %s34
      %s36 = ssub.s32 %s23, %s30
      %s37 = sor.u32 %s35, %s36
      %p38 = scmp.eq.s32.totalorder %s37, 0
      %s40 = sadd.s32 %s39, 1
      %s41 = scalar_select %p38, %s39, %s40
      %p44 = pneg %p38
      %p45 = scmp.eq.s32.totalorder %s15, 1
      %p46 = por %p44, %p45
      %p47 = scmp.ne.s32.totalorder %s39, %s42
      %p48 = scmp.eq.s32.totalorder %s15, 0
      %p49 = por %p47, %p48
      %p50 = scmp.ne.s32.totalorder %s39, %s42
      %p51 = scmp.eq.s32.totalorder %s20, 1
      %p52 = por %p50, %p51
      %p53 = scmp.ne.s32.totalorder %s42, %s43
      %p54 = scmp.eq.s32.totalorder %s20, 0
      %p55 = por %p53, %p54
      %p56 = scmp.ne.s32.totalorder %s42, %s43
      %p57 = scmp.eq.s32.totalorder %s21, 1
      %p58 = por %p56, %p57
      %p60 = scmp.ne.s32.totalorder %s43, %s59
      %p61 = scmp.eq.s32.totalorder %s21, 0
      %p62 = por %p60, %p61
      %s64 = sadd.s32 %s63, 1
      %p67 = scmp.eq.s32.totalorder %s15, 1
      %p68 = scmp.ne.s32.totalorder %s63, %s65
      %p69 = scmp.eq.s32.totalorder %s15, 0
      %p70 = por %p68, %p69
      %p71 = scmp.ne.s32.totalorder %s63, %s65
      %p72 = scmp.eq.s32.totalorder %s20, 1
      %p73 = por %p71, %p72
      %p74 = scmp.ne.s32.totalorder %s65, %s66
      %p75 = scmp.eq.s32.totalorder %s20, 0
      %p76 = por %p74, %p75
      %p77 = scmp.ne.s32.totalorder %s65, %s66
      %p78 = scmp.eq.s32.totalorder %s21, 1
      %p79 = por %p77, %p78
      %p81 = scmp.ne.s32.totalorder %s66, %s80
      %p82 = scmp.eq.s32.totalorder %s21, 0
      %p83 = por %p81, %p82
      %s84 = ssub.s32 %s22, %s34
      %s85 = ssub.s32 %s23, %s30
      %s86 = sor.u32 %s84, %s85
      %p87 = scmp.eq.s32.totalorder %s86, 0
      %s89 = sadd.s32 %s88, 1
      %s90 = scalar_select %p87, %s88, %s89
      %p93 = pneg %p87
      %p94 = scmp.eq.s32.totalorder %s15, 1
      %p95 = por %p93, %p94
      %p96 = scmp.ne.s32.totalorder %s88, %s91
      %p97 = scmp.eq.s32.totalorder %s15, 0
      %p98 = por %p96, %p97
      %p99 = scmp.ne.s32.totalorder %s88, %s91
      %p100 = scmp.eq.s32.totalorder %s20, 1
      %p101 = por %p99, %p100
      %p102 = scmp.ne.s32.totalorder %s91, %s92
      %p103 = scmp.eq.s32.totalorder %s20, 0
      %p104 = por %p102, %p103
      %p105 = scmp.ne.s32.totalorder %s91, %s92
      %p106 = scmp.eq.s32.totalorder %s21, 1
      %p107 = por %p105, %p106
      %p109 = scmp.ne.s32.totalorder %s92, %s108
      %p110 = scmp.eq.s32.totalorder %s21, 0
      %p111 = por %p109, %p110
      %p112 = scmp.le.s32.totalorder 1, %s15
      %p113 = scmp.lt.s32.totalorder %s15, 3
      %p114 = pnand %p112, %p113
      %p115 = pneg %p114
      // Predicated region
      $region9: #{tpu_custom_call.1} parent=5 // pred_check
        _
      $region10: #{tpu_custom_call.1} parent=5 // pred_check_branch
        %117 = sbr.rel (%p114) target = $region12
      $region11: #{tpu_custom_call.1} parent=5 // pred_region
        %s118 = ssub.s32 %s15, 1
        // Predicated region
        $region13: #{tpu_custom_call.1} parent=11 // pred_check
          %p119 = pneg %p76
        $region14: #{tpu_custom_call.1} parent=11 // pred_check_branch
          %121 = sbr.rel (%p119) target = $region16
        $region15: #{tpu_custom_call.1} parent=11 // pred_region
          %s123 = ssub.s32 512, 512
          %124 = vsyncadd [#allocation6], %s123
          %s125 = sshll.u32 [#allocation5], 4
          %s126 = int_to_ptr.vmem [resolvable:$true] %s125
          %131 = dma.hbm_to_vmem [thread:$0]  %s1, 512, %s126, [#allocation6], 128, 128, 8
        $region16: #{tpu_custom_call.1} parent=11 // pred_fallthru
          _
      $region12: #{tpu_custom_call.1} parent=5 // pred_fallthru
        _
      %p132 = scmp.lt.s32.totalorder %s15, 2
      // Predicated region
      $region17: #{tpu_custom_call.1} parent=5 // pred_check
        %p133 = pneg %p132
      $region18: #{tpu_custom_call.1} parent=5 // pred_check_branch
        %135 = sbr.rel (%p133) target = $region20
      $region19: #{tpu_custom_call.1} parent=5 // pred_region
        // Predicated region
        $region21: #{tpu_custom_call.1} parent=19 // pred_check
          %p136 = pneg %p49
        $region22: #{tpu_custom_call.1} parent=19 // pred_check_branch
          %138 = sbr.rel (%p136) target = $region24
        $region23: #{tpu_custom_call.1} parent=19 // pred_region
          %s139 = sand.u32 %s39, 1
          %s140 = scalar_lea.sflag [#allocation3], %s139
          %s141 = sand.u32 %s39, 1
          %s142 = smul.addr %s141, 80
          %s143 = scalar_lea.vmem [#allocation2], %s142
          %s144 = smul.u32 2, %s23
          %s146 = ssub.s32 1280, 1280
          %147 = vsyncadd %s140, %s146
          %s148 = smul.addr %s22, 10
          %s149 = sadd.s32 %s144, %s148
          %s150 = smul.addr %s149, 128
          %s151 = scalar_lea.hbm %s0, %s150
          %s152 = sshll.u32 %s143, 4
          %s153 = int_to_ptr.vmem [resolvable:$true] %s152
          %158 = dma.hbm_to_vmem [thread:$0]  %s151, 1280, %s153, %s140, 256, 256, 16
        $region24: #{tpu_custom_call.1} parent=19 // pred_fallthru
          _
      $region20: #{tpu_custom_call.1} parent=5 // pred_fallthru
        _
      %p159 = scmp.le.s32.totalorder 1, %s15
      %p160 = scmp.lt.s32.totalorder %s15, 3
      %p161 = pnand %p159, %p160
      %p162 = pneg %p161
      // Predicated region
      $region25: #{tpu_custom_call.1} parent=5 // pred_check
        _
      $region26: #{tpu_custom_call.1} parent=5 // pred_check_branch
        %164 = sbr.rel (%p161) target = $region28
      $region27: #{tpu_custom_call.1} parent=5 // pred_region
        %s165 = ssub.s32 %s15, 1
        %s166 = sand.u32 %s42, 1
        %s167 = scalar_lea.sflag [#allocation3], %s166
        %s168 = sand.u32 %s42, 1
        %s169 = smul.addr %s168, 80
        %s170 = scalar_lea.vmem [#allocation2], %s169
        // Predicated region
        $region29: #{tpu_custom_call.1} parent=27 // pred_check
          %p171 = pneg %p55
        $region30: #{tpu_custom_call.1} parent=27 // pred_check_branch
          %173 = sbr.rel (%p171) target = $region32
        $region31: #{tpu_custom_call.1} parent=27 // pred_region
          %174 = dma.done %s167, 1280
        $region32: #{tpu_custom_call.1} parent=27 // pred_fallthru
          _
        // Predicated region
        $region33: #{tpu_custom_call.1} parent=27 // pred_check
          %p175 = pneg %p76
        $region34: #{tpu_custom_call.1} parent=27 // pred_check_branch
          %177 = sbr.rel (%p175) target = $region36
        $region35: #{tpu_custom_call.1} parent=27 // pred_region
          %178 = dma.done [#allocation6], 512
        $region36: #{tpu_custom_call.1} parent=27 // pred_fallthru
          _
        %s179 = sand.u32 %s42, 1
        %s180 = scalar_lea.sflag [#allocation3], %s179
        %s181 = sand.u32 %s42, 1
        %s182 = smul.addr %s181, 80
        %s183 = scalar_lea.vmem [#allocation2], %s182
        %p184 = pneg %p55
        %p185 = pneg %p52
        %p186 = pneg %p76
        %p187 = pneg %p73
        %p188 = pneg %p104
        %p189 = pneg %p101
        %s190 = sand.u32 %s91, 1
        %s191 = scalar_lea.sflag [#allocation4], %s190
        %s192 = sand.u32 %s91, 1
        %s193 = smul.addr %s192, 64
        %s194 = scalar_lea.vmem [#allocation7], %s193
        %s195 = smul.u32 2, %s25
        %s196 = smul.u32 2, %s25
        %v197 = vld [vmem:[#allocation5] sm:$0xff]
        %v198 = vld [vmem:[#allocation5 + $0x8] sm:$0xff]
        %v199 = vld [vmem:[#allocation5 + $0x10] sm:$0xff]
        %v200 = vld [vmem:[#allocation5 + $0x18] sm:$0xff]
        %v201 = vld [vmem:[%s170] sm:$0xff]
        %v202 = vld [vmem:[%s170 + $0x8] sm:$0xff]
        %v203 = vld [vmem:[%s170 + $0x10] sm:$0xff]
        %v204 = vld [vmem:[%s170 + $0x18] sm:$0xff]
        %v205 = vld [vmem:[%s170 + $0x20] sm:$0xff]
        %v206 = vld [vmem:[%s170 + $0x28] sm:$0xff]
        %v207 = vld [vmem:[%s170 + $0x30] sm:$0xff]
        %v208 = vld [vmem:[%s170 + $0x38] sm:$0xff]
        %v209 = vld [vmem:[%s170 + $0x40] sm:$0xff]
        %v210 = vld [vmem:[%s170 + $0x48] sm:$0xff]
        %vm211 = vcmask 326656
        %v213 = vsel %vm211, %v197, 0
        %v216 = vsel %vm211, %v198, 0
        %v219 = vsel %vm211, %v199, 0
        %v222 = vsel %vm211, %v200, 0
        %224 = vmatprep.subr.mxu0 %v202
        %225 = vmatpush1.msra.mxu0 %v201
        %226 = vmatprep.subr.mxu0 %v204
        %227 = vmatpush1.msra.mxu0 %v203
        %228 = vmatprep.subr.mxu0 %v206
        %229 = vmatpush1.msra.mxu0 %v205
        %230 = vmatprep.subr.mxu0 %v208
        %231 = vmatpush1.msra.mxu0 %v207
        %232 = vmatprep.subr.mxu0 %v210
        %233 = vmatpush1.msra.mxu0 %v209
        %234 = vmatprep.subr.mxu0 0.0
        %235 = vmatpush1.msra.mxu0 0.0
        %236 = vmatprep.subr.mxu0 0.0
        %237 = vmatpush1.msra.mxu0 0.0
        %238 = vmatprep.subr.mxu0 0.0
        %239 = vmatpush1.msra.mxu0 0.0
        %240 = vmatprep.subr.mxu0 0.0
        %241 = vmatpush1.msra.mxu0 0.0
        %242 = vmatprep.subr.mxu0 0.0
        %243 = vmatpush1.msra.mxu0 0.0
        %244 = vmatprep.subr.mxu0 0.0
        %245 = vmatpush1.msra.mxu0 0.0
        %246 = vmatprep.subr.mxu0 0.0
        %247 = vmatpush1.msra.mxu0 0.0
        %248 = vmatprep.subr.mxu0 0.0
        %249 = vmatpush1.msra.mxu0 0.0
        %250 = vmatprep.subr.mxu0 0.0
        %251 = vmatpush1.msra.mxu0 0.0
        %252 = vmatprep.subr.mxu0 0.0
        %253 = vmatpush1.msra.mxu0 0.0
        %254 = vmatprep.subr.mxu0 0.0
        %255 = vmatpush1.msra.mxu0 0.0
        %256 = vmatprep.subr.mxu0 0.0
        %257 = vmatpush1.msra.mxu0 0.0
        %258 = vmatprep.subr.mxu0 0.0
        %259 = vmatpush1.msra.mxu0 0.0
        %260 = vmatprep.subr.mxu0 0.0
        %261 = vmatpush1.msra.mxu0 0.0
        %262 = vmatprep.subr.mxu0 0.0
        %263 = vmatpush1.msra.mxu0 0.0
        %264 = vmatprep.subr.mxu0 0.0
        %265 = vmatpush1.msra.mxu0 0.0
        %266 = vmatprep.subr.mxu0 0.0
        %267 = vmatpush1.msra.mxu0 0.0
        %268 = vmatprep.subr.mxu0 0.0
        %269 = vmatpush1.msra.mxu0 0.0
        %270 = vmatprep.subr.mxu0 0.0
        %271 = vmatpush1.msra.mxu0 0.0
        %272 = vmatprep.subr.mxu0 0.0
        %273 = vmatpush1.msra.mxu0 0.0
        %274 = vmatprep.subr.mxu0 0.0
        %275 = vmatpush1.msra.mxu0 0.0
        %276 = vmatprep.subr.mxu0 0.0
        %277 = vmatpush1.msra.mxu0 0.0
        %278 = vmatprep.subr.mxu0 0.0
        %279 = vmatpush1.msra.mxu0 0.0
        %280 = vmatprep.subr.mxu0 0.0
        %281 = vmatpush1.msra.mxu0 0.0
        %282 = vmatprep.subr.mxu0 0.0
        %283 = vmatpush1.msra.mxu0 0.0
        %284 = vmatprep.subr.mxu0 0.0
        %285 = vmatpush1.msra.mxu0 0.0
        %286 = vmatprep.subr.mxu0 0.0
        %287 = vmatpush1.msra.mxu0 0.0
        %288 = vmatprep.mubr.f32.mxu0 0.0
        %289 = vmatmul.mubr.f32.gmra.mrb[0].mxu0 %v213
        %v290 = vpop.f32.mrb[0].mxu0
        %v291 = vadd.f32 0.0, %v290
        %v292 = vpop.f32.mrb[0].mxu0
        %v293 = vadd.f32 0.0, %v292
        %294 = vmatprep.mubr.f32.mxu0 0.0
        %295 = vmatmul.mubr.f32.gmra.mrb[0].mxu0 %v216
        %v296 = vpop.f32.mrb[0].mxu0
        %v297 = vadd.f32 0.0, %v296
        %v298 = vpop.f32.mrb[0].mxu0
        %v299 = vadd.f32 0.0, %v298
        %300 = vmatprep.mubr.f32.mxu0 0.0
        %301 = vmatmul.mubr.f32.gmra.mrb[0].mxu0 %v219
        %v302 = vpop.f32.mrb[0].mxu0
        %v303 = vadd.f32 0.0, %v302
        %v304 = vpop.f32.mrb[0].mxu0
        %v305 = vadd.f32 0.0, %v304
        %306 = vmatprep.mubr.f32.mxu0 0.0
        %307 = vmatmul.mubr.f32.gmra.mrb[0].mxu0 %v222
        %v308 = vpop.f32.mrb[0].mxu0
        %v309 = vadd.f32 0.0, %v308
        %v310 = vpop.f32.mrb[0].mxu0
        %v311 = vadd.f32 0.0, %v310
        %312 = vdwg.mxu0
        %v313 = vxor.u32 %v291, 2147483648
        %v314 = vxor.u32 %v293, 2147483648
        %v315 = vxor.u32 %v297, 2147483648
        %v316 = vxor.u32 %v299, 2147483648
        %v317 = vxor.u32 %v303, 2147483648
        %v318 = vxor.u32 %v305, 2147483648
        %v319 = vxor.u32 %v309, 2147483648
        %v320 = vxor.u32 %v311, 2147483648
        %v321 = vmul.f32 %v313, 1.442695
        %v322 = vpow.pop %v321
        %v323 = vmul.f32 %v314, 1.442695
        %v324 = vpow.pop %v323
        %v325 = vmul.f32 %v315, 1.442695
        %v326 = vpow.pop %v325
        %v327 = vmul.f32 %v316, 1.442695
        %v328 = vpow.pop %v327
        %v329 = vmul.f32 %v317, 1.442695
        %v330 = vpow.pop %v329
        %v331 = vmul.f32 %v318, 1.442695
        %v332 = vpow.pop %v331
        %v333 = vmul.f32 %v319, 1.442695
        %v334 = vpow.pop %v333
        %v335 = vmul.f32 %v320, 1.442695
        %v336 = vpow.pop %v335
        %v337 = vadd.f32 %v322, 1.0
        %v338 = vadd.f32 %v324, 1.0
        %v339 = vadd.f32 %v326, 1.0
        %v340 = vadd.f32 %v328, 1.0
        %v341 = vadd.f32 %v330, 1.0
        %v342 = vadd.f32 %v332, 1.0
        %v343 = vadd.f32 %v334, 1.0
        %v344 = vadd.f32 %v336, 1.0
        %v345 = vrcp.pop %v337
        %v346 = vmul.f32 1.0, %v345
        %v347 = vrcp.pop %v338
        %v348 = vmul.f32 1.0, %v347
        %v349 = vrcp.pop %v339
        %v350 = vmul.f32 1.0, %v349
        %v351 = vrcp.pop %v340
        %v352 = vmul.f32 1.0, %v351
        %v353 = vrcp.pop %v341
        %v354 = vmul.f32 1.0, %v353
        %v355 = vrcp.pop %v342
        %v356 = vmul.f32 1.0, %v355
        %v357 = vrcp.pop %v343
        %v358 = vmul.f32 1.0, %v357
        %v359 = vrcp.pop %v344
        %v360 = vmul.f32 1.0, %v359
        %v361 = vmul.f32 %v291, %v346
        %v362 = vmul.f32 %v293, %v348
        %v363 = vmul.f32 %v297, %v350
        %v364 = vmul.f32 %v299, %v352
        %v365 = vmul.f32 %v303, %v354
        %v366 = vmul.f32 %v305, %v356
        %v367 = vmul.f32 %v309, %v358
        %v368 = vmul.f32 %v311, %v360
        %369 = vst [vmem:[%s194] sm:$0xff] %v361
        %370 = vst [vmem:[%s194 + $0x8] sm:$0xff] %v362
        %371 = vst [vmem:[%s194 + $0x10] sm:$0xff] %v363
        %372 = vst [vmem:[%s194 + $0x18] sm:$0xff] %v364
        %373 = vst [vmem:[%s194 + $0x20] sm:$0xff] %v365
        %374 = vst [vmem:[%s194 + $0x28] sm:$0xff] %v366
        %375 = vst [vmem:[%s194 + $0x30] sm:$0xff] %v367
        %376 = vst [vmem:[%s194 + $0x38] sm:$0xff] %v368
        %s377 = sand.u32 %s91, 1
        %s378 = scalar_lea.sflag [#allocation4], %s377
        %s379 = sand.u32 %s91, 1
        %s380 = smul.addr %s379, 64
        %s381 = scalar_lea.vmem [#allocation7], %s380
        // Predicated region
        $region37: #{tpu_custom_call.1} parent=27 // pred_check
          %p382 = pneg %p101
        $region38: #{tpu_custom_call.1} parent=27 // pred_check_branch
          %384 = sbr.rel (%p382) target = $region40
        $region39: #{tpu_custom_call.1} parent=27 // pred_region
          %s385 = smul.u32 2, %s25
          %s387 = ssub.s32 1024, 1024
          %388 = vsyncadd %s378, %s387
          %s389 = smul.addr %s24, 8
          %s390 = sadd.s32 %s385, %s389
          %s391 = smul.addr %s390, 128
          %s392 = scalar_lea.hbm %s2, %s391
          %s393 = sshll.u32 %s381, 4
          %s394 = int_to_ptr.vmem [resolvable:$true] %s393
          %399 = dma.vmem_to_hbm [thread:$0]  %s394, 1024, %s392, %s378, 256, 256, 16
        $region40: #{tpu_custom_call.1} parent=27 // pred_fallthru
          _
      $region28: #{tpu_custom_call.1} parent=5 // pred_fallthru
        _
      %p400 = scmp.le.s32.totalorder 2, %s15
      // Predicated region
      $region41: #{tpu_custom_call.1} parent=5 // pred_check
        %p401 = pneg %p400
      $region42: #{tpu_custom_call.1} parent=5 // pred_check_branch
        %403 = sbr.rel (%p401) target = $region44
      $region43: #{tpu_custom_call.1} parent=5 // pred_region
        %s404 = ssub.s32 %s15, 2
        // Predicated region
        $region45: #{tpu_custom_call.1} parent=43 // pred_check
          %p405 = pneg %p107
        $region46: #{tpu_custom_call.1} parent=43 // pred_check_branch
          %407 = sbr.rel (%p405) target = $region48
        $region47: #{tpu_custom_call.1} parent=43 // pred_region
          %s408 = sand.u32 %s92, 1
          %s409 = scalar_lea.sflag [#allocation4], %s408
          %s410 = sand.u32 %s92, 1
          %s411 = smul.addr %s410, 64
          %s412 = scalar_lea.vmem [#allocation7], %s411
          %413 = dma.done %s409, 1024
        $region48: #{tpu_custom_call.1} parent=43 // pred_fallthru
          _
      $region44: #{tpu_custom_call.1} parent=5 // pred_fallthru
        _
    $region6: #{tpu_custom_call.1} parent=1 // loop_footer
      %s19 = sadd.s32 1, %s15
    $region7: #{tpu_custom_call.1} parent=1 // loop_footer_branch
      %14 = sbr.rel target = $region3
    $region8: #{tpu_custom_call.1} parent=1 // loop_exit
      _
    %414 = vsyncpa [#allocation3], 1
    %s415 = scalar_lea.sflag [#allocation3], 1
    %416 = vsyncpa %s415, 1
    %417 = vsyncpa [#allocation6], 1
    %418 = vsyncpa [#allocation4], 1
    %s419 = scalar_lea.sflag [#allocation4], 1
    %420 = vsyncpa %s419, 1

</llo_original>
